<compile_context>
chip_gen: v6e
topology: v6e:2x2x1
jax: 0.10.0
libtpu: 0.0.40
codegen_flags: <defaults>
</compile_context>

<pallas_src>
import functools

import jax
import jax.numpy as jnp
from jax.experimental import pallas as pl
from jax.experimental.pallas import tpu as pltpu

_EPS = 1e-5  # BatchNorm1d default eps


# ----------------------------------------------------------------------------- kernel


def convblock_kernel(x_ref, w_ref, b_ref, alpha_ref, o_ref, xp_ref, *,
                     kernel_size, padding):
    """Fused Conv1d(pad=K//2) + folded-BatchNorm(eval) + PReLU for one batch element.

    x_ref    : (Cin, L)          VMEM  input slice for this grid step
    w_ref    : (K, Cout, Cin)    VMEM  BN-folded conv weight, one (Cout, Cin) tile per tap
    b_ref    : (Cout, 1)         VMEM  BN-folded conv bias
    alpha_ref: (1,)              SMEM  PReLU slope (scalar)
    o_ref    : (Cout, L_out)     VMEM  output slice
    xp_ref   : (Cin, L + 2*pad)  VMEM  scratch: zero-padded input
    """
    cin, L = x_ref.shape
    cout, L_out = o_ref.shape

    # Zero-padded copy of the input in VMEM.  The zero fill provides the conv boundary
    # padding; re-zeroed every grid step so it is correct under megacore sharding.
    xp_ref[...] = jnp.zeros_like(xp_ref)
    xp_ref[:, padding:padding + L] = x_ref[...]

    # K shifted MXU matmuls accumulated in f32 registers (static unroll, K is small).
    acc = jnp.zeros((cout, L_out), jnp.float32)
    for k in range(kernel_size):
        acc = acc + jnp.dot(w_ref[k], xp_ref[:, k:k + L_out],
                            preferred_element_type=jnp.float32)

    y = acc + b_ref[...]                       # (Cout, 1) broadcast over length

    # PReLU with scalar alpha from SMEM.
    alpha = alpha_ref[0]
    o_ref[...] = jnp.where(y > 0.0, y, alpha * y)


# ----------------------------------------------------------------------------- wrapper


def conv_block(x, conv_w, conv_b, bn_gamma, bn_beta, bn_mean, bn_var, prelu_alpha,
               eps=_EPS):
    """Forward pass of ConvBlock(in_channels, out_channels, kernel_size) in eval mode.

    x           : (B, Cin, L)  float32
    conv_w      : (Cout, Cin, K)      (PyTorch Conv1d weight layout)
    conv_b      : (Cout,)
    bn_*        : (Cout,)             (BatchNorm1d affine params and running stats)
    prelu_alpha : scalar / (1,)       (PReLU weight, num_parameters=1)
    returns     : (B, Cout, L_out)    with L_out = L + 2*(K//2) - K + 1  (== L, odd K)
    """
    B, Cin, L = x.shape
    Cout, Cin_w, K = conv_w.shape
    assert Cin_w == Cin
    assert K % 2 == 1, "kernel_size must be odd (padding = K // 2 keeps the length)"
    pad = K // 2
    L_out = L + 2 * pad - K + 1  # == L for odd K

    # Fold BatchNorm (eval mode) and the conv bias into the conv weight/bias.
    scale = bn_gamma * jax.lax.rsqrt(bn_var + eps)                        # (Cout,)
    w_folded = conv_w * scale[:, None, None]                              # (Cout, Cin, K)
    w_taps = jnp.transpose(w_folded, (2, 0, 1)).astype(jnp.float32)       # (K, Cout, Cin)
    b2 = ((conv_b - bn_mean) * scale + bn_beta).reshape(Cout, 1).astype(jnp.float32)
    alpha = jnp.reshape(prelu_alpha, (1,)).astype(jnp.float32)

    kernel = functools.partial(convblock_kernel, kernel_size=K, padding=pad)

    return pl.pallas_call(
        kernel,
        out_shape=jax.ShapeDtypeStruct((B, Cout, L_out), jnp.float32),
        grid=(B,),
        in_specs=[
            pl.BlockSpec((None, Cin, L), lambda i: (i, 0, 0)),       # x: one batch row
            pl.BlockSpec((K, Cout, Cin), lambda i: (0, 0, 0)),       # folded weight taps
            pl.BlockSpec((Cout, 1), lambda i: (0, 0)),               # folded bias
            pl.BlockSpec(memory_space=pltpu.MemorySpace.SMEM),       # PReLU alpha scalar
        ],
        out_specs=pl.BlockSpec((None, Cout, L_out), lambda i: (i, 0, 0)),
        scratch_shapes=[pltpu.VMEM((Cin, L + 2 * pad), jnp.float32)],
        compiler_params=pltpu.CompilerParams(
            dimension_semantics=("parallel",)),                      # shard batch over TCs
    )(x.astype(jnp.float32), w_taps, b2, alpha)


# ----------------------------------------------------------------------------- reference


def conv_block_ref(x, conv_w, conv_b, bn_gamma, bn_beta, bn_mean, bn_var, prelu_alpha,
                   eps=_EPS):
    """Pure-JAX reference mirroring the PyTorch module (eval mode)."""
    pad = conv_w.shape[2] // 2
    y = jax.lax.conv_general_dilated(
        x, conv_w, window_strides=(1,), padding=[(pad, pad)],
        dimension_numbers=("NCH", "OIH", "NCH"))
    y = y + conv_b[None, :, None]
    inv = jax.lax.rsqrt(bn_var + eps)
    y = (y - bn_mean[None, :, None]) * inv[None, :, None] * bn_gamma[None, :, None] \
        + bn_beta[None, :, None]
    a = jnp.reshape(prelu_alpha, ())
    return jnp.where(y > 0, y, a * y)


# ----------------------------------------------------------------------------- main


if __name__ == "__main__":
    key = jax.random.PRNGKey(0)
    k_x, k_w, k_b, k_g, k_bt, k_m, k_v = jax.random.split(key, 7)

    # ConvBlock(in_channels=4, out_channels=32, kernel_size=3); B=2, L=16.
    B, Cin, L, Cout, K = 2, 4, 16, 32, 3

    x = jax.random.normal(k_x, (B, Cin, L), jnp.float32)
    conv_w = 0.1 * jax.random.normal(k_w, (Cout, Cin, K), jnp.float32)
    conv_b = 0.1 * jax.random.normal(k_b, (Cout,), jnp.float32)
    bn_gamma = jax.random.uniform(k_g, (Cout,), jnp.float32, 0.5, 1.5)
    bn_beta = 0.1 * jax.random.normal(k_bt, (Cout,), jnp.float32)
    bn_mean = 0.1 * jax.random.normal(k_m, (Cout,), jnp.float32)
    bn_var = jax.random.uniform(k_v, (Cout,), jnp.float32, 0.5, 1.5)
    prelu_alpha = jnp.full((1,), 0.25, jnp.float32)   # PyTorch PReLU default init

    out = jax.jit(conv_block)(x, conv_w, conv_b, bn_gamma, bn_beta,
                              bn_mean, bn_var, prelu_alpha)
    out = jax.block_until_ready(out)

    ref = conv_block_ref(x, conv_w, conv_b, bn_gamma, bn_beta,
                         bn_mean, bn_var, prelu_alpha)
    ref = jax.block_until_ready(ref)

    assert out.shape == (B, Cout, L) and out.dtype == jnp.float32
    assert bool(jnp.allclose(out, ref, rtol=1e-4, atol=1e-4)), "mismatch vs reference"
    print("KERNEL_OK")
</pallas_src>

<mosaic_0001>
module attributes {stable_mosaic.version = 11 : i64} {
  func.func @convblock_kernel(%arg0: i32, %arg1: memref<1x4x16xf32, #tpu.memory_space<vmem>>, %arg2: memref<3x32x4xf32, #tpu.memory_space<vmem>>, %arg3: memref<32x1xf32, #tpu.memory_space<vmem>>, %arg4: memref<1xf32, #tpu.memory_space<smem>>, %arg5: memref<1x32x16xf32, #tpu.memory_space<vmem>>, %arg6: memref<4x18xf32, #tpu.memory_space<vmem>>) attributes {dimension_semantics = [#tpu.dimension_semantics<parallel>], iteration_bounds = array<i64: 2>, scalar_prefetch = 0 : i64, scratch_operands = 1 : i64, tpu.core_type = #tpu.core_type<tc>, window_params = [{transform_indices = @transform_0, window_bounds = array<i64: 1, 4, 16>}, {pipeline_mode = #tpu.pipeline_mode<synchronous>, transform_indices = @transform_1, window_bounds = array<i64: 3, 32, 4>}, {pipeline_mode = #tpu.pipeline_mode<synchronous>, transform_indices = @transform_2, window_bounds = array<i64: 32, 1>}, {transform_indices = @transform_3, window_bounds = array<i64: 1>}, {transform_indices = @transform_4, window_bounds = array<i64: 1, 32, 16>}]} {
    %cst = arith.constant 0.000000e+00 : f32
    %0 = vector.broadcast %cst : f32 to vector<4x18xf32>
    %c0 = arith.constant 0 : index
    %c0_0 = arith.constant 0 : index
    %1 = vector.load %arg6[%c0, %c0_0] : memref<4x18xf32, #tpu.memory_space<vmem>>, vector<4x18xf32>
    tpu.vector_store %arg6[%c0, %c0_0], %0 {strides = array<i32>} : memref<4x18xf32, #tpu.memory_space<vmem>>, vector<4x18xf32>,
    %c0_1 = arith.constant 0 : index
    %c0_2 = arith.constant 0 : index
    %c0_3 = arith.constant 0 : index
    %2 = vector.load %arg1[%c0_1, %c0_2, %c0_3] : memref<1x4x16xf32, #tpu.memory_space<vmem>>, vector<1x4x16xf32>
    %3 = vector.shape_cast %2 : vector<1x4x16xf32> to vector<4x16xf32>
    %c0_4 = arith.constant 0 : index
    %c1 = arith.constant 1 : index
    %4 = vector.load %arg6[%c0_4, %c1] : memref<4x18xf32, #tpu.memory_space<vmem>>, vector<4x16xf32>
    tpu.vector_store %arg6[%c0_4, %c1], %3 {strides = array<i32>} : memref<4x18xf32, #tpu.memory_space<vmem>>, vector<4x16xf32>,
    %cst_5 = arith.constant 0.000000e+00 : f32
    %5 = vector.broadcast %cst_5 : f32 to vector<32x16xf32>
    %c0_6 = arith.constant 0 : index
    %c0_7 = arith.constant 0 : index
    %c0_8 = arith.constant 0 : index
    %6 = vector.load %arg2[%c0_6, %c0_7, %c0_8] : memref<3x32x4xf32, #tpu.memory_space<vmem>>, vector<1x32x4xf32>
    %7 = vector.shape_cast %6 : vector<1x32x4xf32> to vector<32x4xf32>
    %c0_9 = arith.constant 0 : index
    %c0_10 = arith.constant 0 : index
    %8 = vector.load %arg6[%c0_9, %c0_10] : memref<4x18xf32, #tpu.memory_space<vmem>>, vector<4x16xf32>
    %cst_11 = arith.constant dense<0.000000e+00> : vector<32x16xf32>
    %9 = tpu.matmul %7, %8, %cst_11 {dimension_numbers = #tpu.dot_dimension_numbers<[1], [0], [0], [1], [0, 0, 1, 1], [], []>} : vector<32x4xf32>, vector<4x16xf32>, vector<32x16xf32> -> vector<32x16xf32>
    %10 = arith.addf %5, %9 : vector<32x16xf32>
    %c1_12 = arith.constant 1 : index
    %c0_13 = arith.constant 0 : index
    %c0_14 = arith.constant 0 : index
    %11 = vector.load %arg2[%c1_12, %c0_13, %c0_14] : memref<3x32x4xf32, #tpu.memory_space<vmem>>, vector<1x32x4xf32>
    %12 = vector.shape_cast %11 : vector<1x32x4xf32> to vector<32x4xf32>
    %c0_15 = arith.constant 0 : index
    %c1_16 = arith.constant 1 : index
    %13 = vector.load %arg6[%c0_15, %c1_16] : memref<4x18xf32, #tpu.memory_space<vmem>>, vector<4x16xf32>
    %cst_17 = arith.constant dense<0.000000e+00> : vector<32x16xf32>
    %14 = tpu.matmul %12, %13, %cst_17 {dimension_numbers = #tpu.dot_dimension_numbers<[1], [0], [0], [1], [0, 0, 1, 1], [], []>} : vector<32x4xf32>, vector<4x16xf32>, vector<32x16xf32> -> vector<32x16xf32>
    %15 = arith.addf %10, %14 : vector<32x16xf32>
    %c2 = arith.constant 2 : index
    %c0_18 = arith.constant 0 : index
    %c0_19 = arith.constant 0 : index
    %16 = vector.load %arg2[%c2, %c0_18, %c0_19] : memref<3x32x4xf32, #tpu.memory_space<vmem>>, vector<1x32x4xf32>
    %17 = vector.shape_cast %16 : vector<1x32x4xf32> to vector<32x4xf32>
    %c0_20 = arith.constant 0 : index
    %c2_21 = arith.constant 2 : index
    %18 = vector.load %arg6[%c0_20, %c2_21] : memref<4x18xf32, #tpu.memory_space<vmem>>, vector<4x16xf32>
    %cst_22 = arith.constant dense<0.000000e+00> : vector<32x16xf32>
    %19 = tpu.matmul %17, %18, %cst_22 {dimension_numbers = #tpu.dot_dimension_numbers<[1], [0], [0], [1], [0, 0, 1, 1], [], []>} : vector<32x4xf32>, vector<4x16xf32>, vector<32x16xf32> -> vector<32x16xf32>
    %20 = arith.addf %15, %19 : vector<32x16xf32>
    %c0_23 = arith.constant 0 : index
    %c0_24 = arith.constant 0 : index
    %21 = vector.load %arg3[%c0_23, %c0_24] : memref<32x1xf32, #tpu.memory_space<vmem>>, vector<32x1xf32>
    %22 = vector.broadcast %21 : vector<32x1xf32> to vector<32x16xf32>
    %23 = arith.addf %20, %22 : vector<32x16xf32>
    %c0_25 = arith.constant 0 : index
    %24 = memref.load %arg4[%c0_25] : memref<1xf32, #tpu.memory_space<smem>>
    %cst_26 = arith.constant 0.000000e+00 : f32
    %25 = vector.broadcast %cst_26 : f32 to vector<32x16xf32>
    %26 = arith.cmpf ogt, %23, %25 : vector<32x16xf32>
    %27 = vector.broadcast %24 : f32 to vector<32x16xf32>
    %28 = arith.mulf %27, %23 : vector<32x16xf32>
    %29 = arith.select %26, %23, %28 : vector<32x16xi1>, vector<32x16xf32>
    %c0_27 = arith.constant 0 : index
    %c0_28 = arith.constant 0 : index
    %c0_29 = arith.constant 0 : index
    %30 = vector.load %arg5[%c0_27, %c0_28, %c0_29] : memref<1x32x16xf32, #tpu.memory_space<vmem>>, vector<1x32x16xf32>
    %31 = vector.shape_cast %30 : vector<1x32x16xf32> to vector<32x16xf32>
    %32 = vector.shape_cast %29 : vector<32x16xf32> to vector<1x32x16xf32>
    tpu.vector_store %arg5[%c0_27, %c0_28, %c0_29], %32 {strides = array<i32>} : memref<1x32x16xf32, #tpu.memory_space<vmem>>, vector<1x32x16xf32>,
    return
  }
  func.func @transform_0(%arg0: i32) -> (i32, i32, i32) {
    %c0_i32 = arith.constant 0 : i32
    %c0_i32_0 = arith.constant 0 : i32
    %c0_i32_1 = arith.constant 0 : i32
    return %arg0, %c0_i32, %c0_i32_0 : i32, i32, i32
  }
  func.func @transform_1(%arg0: i32) -> (i32, i32, i32) {
    %c0_i32 = arith.constant 0 : i32
    %c0_i32_0 = arith.constant 0 : i32
    %c0_i32_1 = arith.constant 0 : i32
    %c0_i32_2 = arith.constant 0 : i32
    return %c0_i32, %c0_i32_0, %c0_i32_1 : i32, i32, i32
  }
  func.func @transform_2(%arg0: i32) -> (i32, i32) {
    %c0_i32 = arith.constant 0 : i32
    %c0_i32_0 = arith.constant 0 : i32
    %c0_i32_1 = arith.constant 0 : i32
    return %c0_i32, %c0_i32_0 : i32, i32
  }
  func.func @transform_3(%arg0: i32) -> i32 {
    %c0_i32 = arith.constant 0 : i32
    %c0_i32_0 = arith.constant 0 : i32
    return %c0_i32 : i32
  }
  func.func @transform_4(%arg0: i32) -> (i32, i32, i32) {
    %c0_i32 = arith.constant 0 : i32
    %c0_i32_0 = arith.constant 0 : i32
    %c0_i32_1 = arith.constant 0 : i32
    return %arg0, %c0_i32, %c0_i32_0 : i32, i32, i32
  }
}

</mosaic_0001>

<llo_original>
// kernel: conv_block.1
$region0: #{conv_block.1}
  #allocation0 [shape = 'u32[]', space=smem, size = 0x4, offset = 0x4, fixed_abs, tag = 'smem constant byte address 0x4 - core index']
  #allocation1 [shape = 'u32[144,128]{1,0:T(1,128)}', space=vmem, size = 0x12000, scoped, tag = 'internal scratch']
  #allocation2 [shape = 'f32[4,18]{1,0:T(4,128)}', space=vmem, size = 0x800, scoped, tag = 'scratch operand']
  #allocation3 [shape = 'f32[1]{0:T(128)S(6)}', space=smem, size = 0x200, scoped, tag = 'scoped memory for conv_block.1']
  %s0 = inlined_call_operand.vmem [shape: f32[2,4,16], index: 0, kind: input, shape index: {}]
  %s1 = inlined_call_operand.vmem [shape: f32[3,32,4], index: 1, kind: input, shape index: {}]
  %s2 = inlined_call_operand.vmem [shape: f32[32,1], index: 2, kind: input, shape index: {}]
  %s3 = inlined_call_operand.<no memory space> [shape: f32[1], index: 3, kind: input, shape index: {}]
  %s4 = inlined_call_operand.vmem [shape: f32[2,32,16], index: 4, kind: output, shape index: {}]
  %s5 = sld [smem:[#allocation0]]
  $region49: #{conv_block.1} parent=0
    _
  %s7 = ssub.s32 1, %s5
  %s8 = scalar_select 0, %s7, %s5
  %9 = sst [smem:[#allocation3]] %s3
  loop: start=0, step=1, limit=4
  $region2: #{conv_block.1} parent=0 // loop_pre_header
    _
  $region3: #{conv_block.1} parent=0 // loop_header
    %s11 = sphi 0, %s15
    %p12 = scmp.ge.s32.totalorder %s11, 4
    %s21 = sphi 0, %s23
    %s24 = sphi 0, %s21
    %s25 = sphi 0, %s24
    %s41 = sphi 0, %s25
    %s45 = sphi 0, %s45
    %s47 = sphi 0, %s45
    %s48 = sphi 0, %s47
    %s62 = sphi 0, %s48
    %s66 = sphi 0, %s66
    %s68 = sphi 0, %s66
    %s69 = sphi 0, %s68
    %s83 = sphi 0, %s69
    %s87 = sphi 0, %s87
    %s89 = sphi 0, %s87
    %s90 = sphi 0, %s89
    %s104 = sphi 0, %s90
    %s110 = sphi 0, %s112
    %s113 = sphi 0, %s110
    %s114 = sphi 0, %s113
    %s130 = sphi 0, %s114
  $region4: #{conv_block.1} parent=0 // loop_header_branch
    %14 = sbr.rel (%p12) target = $region8
  $region5: #{conv_block.1} parent=0 // loop_body
    %s16 = ssub.s32 %s11, 1
    %s17 = ssub.s32 %s11, 2
    %s18 = sadd.s32 %s11, 1
    %s19 = ssub.s32 %s11, %s18
    %p20 = scmp.eq.s32.totalorder %s19, 0
    %s22 = sadd.s32 %s21, 1
    %s23 = scalar_select %p20, %s21, %s22
    %p26 = pneg %p20
    %p27 = scmp.eq.s32.totalorder %s11, 1
    %p28 = por %p26, %p27
    %p29 = scmp.ne.s32.totalorder %s21, %s24
    %p30 = scmp.eq.s32.totalorder %s11, 0
    %p31 = por %p29, %p30
    %p32 = scmp.ne.s32.totalorder %s21, %s24
    %p33 = scmp.eq.s32.totalorder %s16, 1
    %p34 = por %p32, %p33
    %p35 = scmp.ne.s32.totalorder %s24, %s25
    %p36 = scmp.eq.s32.totalorder %s16, 0
    %p37 = por %p35, %p36
    %p38 = scmp.ne.s32.totalorder %s24, %s25
    %p39 = scmp.eq.s32.totalorder %s17, 1
    %p40 = por %p38, %p39
    %p42 = scmp.ne.s32.totalorder %s25, %s41
    %p43 = scmp.eq.s32.totalorder %s17, 0
    %p44 = por %p42, %p43
    %s46 = sadd.s32 %s45, 1
    %p49 = scmp.eq.s32.totalorder %s11, 1
    %p50 = scmp.ne.s32.totalorder %s45, %s47
    %p51 = scmp.eq.s32.totalorder %s11, 0
    %p52 = por %p50, %p51
    %p53 = scmp.ne.s32.totalorder %s45, %s47
    %p54 = scmp.eq.s32.totalorder %s16, 1
    %p55 = por %p53, %p54
    %p56 = scmp.ne.s32.totalorder %s47, %s48
    %p57 = scmp.eq.s32.totalorder %s16, 0
    %p58 = por %p56, %p57
    %p59 = scmp.ne.s32.totalorder %s47, %s48
    %p60 = scmp.eq.s32.totalorder %s17, 1
    %p61 = por %p59, %p60
    %p63 = scmp.ne.s32.totalorder %s48, %s62
    %p64 = scmp.eq.s32.totalorder %s17, 0
    %p65 = por %p63, %p64
    %s67 = sadd.s32 %s66, 1
    %p70 = scmp.eq.s32.totalorder %s11, 1
    %p71 = scmp.ne.s32.totalorder %s66, %s68
    %p72 = scmp.eq.s32.totalorder %s11, 0
    %p73 = por %p71, %p72
    %p74 = scmp.ne.s32.totalorder %s66, %s68
    %p75 = scmp.eq.s32.totalorder %s16, 1
    %p76 = por %p74, %p75
    %p77 = scmp.ne.s32.totalorder %s68, %s69
    %p78 = scmp.eq.s32.totalorder %s16, 0
    %p79 = por %p77, %p78
    %p80 = scmp.ne.s32.totalorder %s68, %s69
    %p81 = scmp.eq.s32.totalorder %s17, 1
    %p82 = por %p80, %p81
    %p84 = scmp.ne.s32.totalorder %s69, %s83
    %p85 = scmp.eq.s32.totalorder %s17, 0
    %p86 = por %p84, %p85
    %s88 = sadd.s32 %s87, 1
    %p91 = scmp.eq.s32.totalorder %s11, 1
    %p92 = scmp.ne.s32.totalorder %s87, %s89
    %p93 = scmp.eq.s32.totalorder %s11, 0
    %p94 = por %p92, %p93
    %p95 = scmp.ne.s32.totalorder %s87, %s89
    %p96 = scmp.eq.s32.totalorder %s16, 1
    %p97 = por %p95, %p96
    %p98 = scmp.ne.s32.totalorder %s89, %s90
    %p99 = scmp.eq.s32.totalorder %s16, 0
    %p100 = por %p98, %p99
    %p101 = scmp.ne.s32.totalorder %s89, %s90
    %p102 = scmp.eq.s32.totalorder %s17, 1
    %p103 = por %p101, %p102
    %p105 = scmp.ne.s32.totalorder %s90, %s104
    %p106 = scmp.eq.s32.totalorder %s17, 0
    %p107 = por %p105, %p106
    %s108 = ssub.s32 %s11, %s18
    %p109 = scmp.eq.s32.totalorder %s108, 0
    %s111 = sadd.s32 %s110, 1
    %s112 = scalar_select %p109, %s110, %s111
    %p115 = pneg %p109
    %p116 = scmp.eq.s32.totalorder %s11, 1
    %p117 = por %p115, %p116
    %p118 = scmp.ne.s32.totalorder %s110, %s113
    %p119 = scmp.eq.s32.totalorder %s11, 0
    %p120 = por %p118, %p119
    %p121 = scmp.ne.s32.totalorder %s110, %s113
    %p122 = scmp.eq.s32.totalorder %s16, 1
    %p123 = por %p121, %p122
    %p124 = scmp.ne.s32.totalorder %s113, %s114
    %p125 = scmp.eq.s32.totalorder %s16, 0
    %p126 = por %p124, %p125
    %p127 = scmp.ne.s32.totalorder %s113, %s114
    %p128 = scmp.eq.s32.totalorder %s17, 1
    %p129 = por %p127, %p128
    %p131 = scmp.ne.s32.totalorder %s114, %s130
    %p132 = scmp.eq.s32.totalorder %s17, 0
    %p133 = por %p131, %p132
    %p134 = scmp.le.s32.totalorder 1, %s11
    %p135 = scmp.lt.s32.totalorder %s11, 3
    %p136 = pnand %p134, %p135
    %p137 = pneg %p136
    // Predicated region
    $region9: #{conv_block.1} parent=5 // pred_check
      _
    $region10: #{conv_block.1} parent=5 // pred_check_branch
      %139 = sbr.rel (%p136) target = $region12
    $region11: #{conv_block.1} parent=5 // pred_region
      %s140 = ssub.s32 %s11, 1
      // Predicated region
      $region13: #{conv_block.1} parent=11 // pred_check
        %p141 = pneg %p58
      $region14: #{conv_block.1} parent=11 // pred_check_branch
        %143 = sbr.rel (%p141) target = $region16
      $region15: #{conv_block.1} parent=11 // pred_region
        _
      $region16: #{conv_block.1} parent=11 // pred_fallthru
        _
      // Predicated region
      $region17: #{conv_block.1} parent=11 // pred_check
        %p144 = pneg %p79
      $region18: #{conv_block.1} parent=11 // pred_check_branch
        %146 = sbr.rel (%p144) target = $region20
      $region19: #{conv_block.1} parent=11 // pred_region
        _
      $region20: #{conv_block.1} parent=11 // pred_fallthru
        _
      // Predicated region
      $region21: #{conv_block.1} parent=11 // pred_check
        %p147 = pneg %p100
      $region22: #{conv_block.1} parent=11 // pred_check_branch
        %149 = sbr.rel (%p147) target = $region24
      $region23: #{conv_block.1} parent=11 // pred_region
        _
      $region24: #{conv_block.1} parent=11 // pred_fallthru
        _
    $region12: #{conv_block.1} parent=5 // pred_fallthru
      _
    %p150 = scmp.lt.s32.totalorder %s11, 2
    // Predicated region
    $region25: #{conv_block.1} parent=5 // pred_check
      %p151 = pneg %p150
    $region26: #{conv_block.1} parent=5 // pred_check_branch
      %153 = sbr.rel (%p151) target = $region28
    $region27: #{conv_block.1} parent=5 // pred_region
      // Predicated region
      $region29: #{conv_block.1} parent=27 // pred_check
        %p154 = pneg %p31
      $region30: #{conv_block.1} parent=27 // pred_check_branch
        %156 = sbr.rel (%p154) target = $region32
      $region31: #{conv_block.1} parent=27 // pred_region
        %p157 = scmp.lt.s32.totalorder %s11, 1
        %s158 = scalar_select %p157, %s11, 1
        %s159 = smul.addr %s158, 4
        %s160 = scalar_lea.vmem %s0, %s159
      $region32: #{conv_block.1} parent=27 // pred_fallthru
        _
    $region28: #{conv_block.1} parent=5 // pred_fallthru
      _
    %p161 = scmp.le.s32.totalorder 1, %s11
    %p162 = scmp.lt.s32.totalorder %s11, 3
    %p163 = pnand %p161, %p162
    %p164 = pneg %p163
    // Predicated region
    $region33: #{conv_block.1} parent=5 // pred_check
      _
    $region34: #{conv_block.1} parent=5 // pred_check_branch
      %166 = sbr.rel (%p163) target = $region36
    $region35: #{conv_block.1} parent=5 // pred_region
      %s167 = ssub.s32 %s11, 1
      %p168 = scmp.lt.s32.totalorder %s16, 1
      %s169 = scalar_select %p168, %s16, 1
      %s170 = smul.addr %s169, 4
      %s171 = scalar_lea.vmem %s0, %s170
      %p172 = pneg %p37
      %p173 = pneg %p34
      %p174 = pneg %p58
      %p175 = pneg %p55
      %p176 = pneg %p79
      %p177 = pneg %p76
      %p178 = pneg %p100
      %p179 = pneg %p97
      %p180 = pneg %p126
      %p181 = pneg %p123
      %p182 = scmp.lt.s32.totalorder %s16, 1
      %s183 = scalar_select %p182, %s16, 1
      %s184 = smul.addr %s183, 4
      %s185 = smul.addr %s184, 8
      %s186 = scalar_lea.vmem %s4, %s185
      %p187 = scmp.lt.s32.totalorder %s16, 1
      %s188 = scalar_select %p187, %s16, 1
      %s189 = smul.addr %s188, 4
      %s190 = scalar_lea.vmem %s0, %s189
      %p191 = scmp.lt.s32.totalorder %s16, 1
      %s192 = scalar_select %p191, %s16, 1
      %s193 = smul.addr %s192, 4
      %s194 = smul.addr %s193, 8
      %s195 = scalar_lea.vmem %s4, %s194
      %vm196 = vcmask 142336
      %197 = vst.msk [vmem:[#allocation2] sm:$0xf] %vm196, 0.0
      %v198 = vld [vmem:[%s190] sm:$0xf]
      %200 = vrot.lane.b32.xlu0 %v198, 1
      %v201 = vpop.permute.xlu0 %200
      %vm203 = vcmask 134152
      %204 = vst.msk [vmem:[#allocation2] sm:$0xf] %vm203, %v201
      %v205 = vld [vmem:[%s1] sm:$0xff]
      %v206 = vld [vmem:[%s1 + $0x8] sm:$0xff]
      %v207 = vld [vmem:[%s1 + $0x10] sm:$0xff]
      %v208 = vld [vmem:[%s1 + $0x18] sm:$0xff]
      %v209 = vld [vmem:[#allocation2] sm:$0xf]
      %s210 = scalar_lea.vmem %s1, 32
      %v211 = vld [vmem:[%s210] sm:$0xff]
      %v212 = vld [vmem:[%s210 + $0x8] sm:$0xff]
      %v213 = vld [vmem:[%s210 + $0x10] sm:$0xff]
      %v214 = vld [vmem:[%s210 + $0x18] sm:$0xff]
      %216 = vrot.lane.b32.xlu0 %v209, 127
      %v217 = vpop.permute.xlu0 %216
      %vm218 = vcmask 31744
      %v220 = vsel %vm218, %v211, 0
      %v223 = vsel %vm218, %v212, 0
      %v226 = vsel %vm218, %v213, 0
      %v229 = vsel %vm218, %v214, 0
      %vm231 = vcmask 1043456
      %v232 = vsel %vm231, %v217, 0
      %234 = vmatprep.subr.mxu0 0.0
      %235 = vmatpush1.msra.mxu0 0.0
      %236 = vmatprep.subr.mxu0 0.0
      %237 = vmatpush1.msra.mxu0 0.0
      %238 = vmatprep.subr.mxu0 0.0
      %239 = vmatpush1.msra.mxu0 0.0
      %240 = vmatprep.subr.mxu0 0.0
      %241 = vmatpush1.msra.mxu0 0.0
      %242 = vmatprep.subr.mxu0 0.0
      %243 = vmatpush1.msra.mxu0 0.0
      %244 = vmatprep.subr.mxu0 0.0
      %245 = vmatpush1.msra.mxu0 0.0
      %246 = vmatprep.subr.mxu0 0.0
      %247 = vmatpush1.msra.mxu0 0.0
      %248 = vmatprep.subr.mxu0 0.0
      %249 = vmatpush1.msra.mxu0 0.0
      %250 = vmatprep.subr.mxu0 0.0
      %251 = vmatpush1.msra.mxu0 0.0
      %252 = vmatprep.subr.mxu0 0.0
      %253 = vmatpush1.msra.mxu0 0.0
      %254 = vmatprep.subr.mxu0 0.0
      %255 = vmatpush1.msra.mxu0 0.0
      %256 = vmatprep.subr.mxu0 0.0
      %257 = vmatpush1.msra.mxu0 0.0
      %258 = vmatprep.subr.mxu0 0.0
      %259 = vmatpush1.msra.mxu0 0.0
      %260 = vmatprep.subr.mxu0 0.0
      %261 = vmatpush1.msra.mxu0 0.0
      %262 = vmatprep.subr.mxu0 0.0
      %263 = vmatpush1.msra.mxu0 0.0
      %264 = vmatprep.subr.mxu0 0.0
      %265 = vmatpush1.msra.mxu0 %v232
      %266 = vmatprep.subr.mxu0 0.0
      %267 = vmatpush2.msra.mxu0 0.0
      %268 = vmatprep.subr.mxu0 0.0
      %269 = vmatpush2.msra.mxu0 0.0
      %270 = vmatprep.subr.mxu0 0.0
      %271 = vmatpush2.msra.mxu0 0.0
      %272 = vmatprep.subr.mxu0 0.0
      %273 = vmatpush2.msra.mxu0 0.0
      %274 = vmatprep.subr.mxu0 0.0
      %275 = vmatpush2.msra.mxu0 0.0
      %276 = vmatprep.subr.mxu0 0.0
      %277 = vmatpush2.msra.mxu0 0.0
      %278 = vmatprep.subr.mxu0 0.0
      %279 = vmatpush2.msra.mxu0 0.0
      %280 = vmatprep.subr.mxu0 0.0
      %281 = vmatpush2.msra.mxu0 0.0
      %282 = vmatprep.subr.mxu0 0.0
      %283 = vmatpush2.msra.mxu0 0.0
      %284 = vmatprep.subr.mxu0 0.0
      %285 = vmatpush2.msra.mxu0 0.0
      %286 = vmatprep.subr.mxu0 0.0
      %287 = vmatpush2.msra.mxu0 0.0
      %288 = vmatprep.subr.mxu0 0.0
      %289 = vmatpush2.msra.mxu0 0.0
      %290 = vmatprep.subr.mxu0 0.0
      %291 = vmatpush2.msra.mxu0 0.0
      %292 = vmatprep.subr.mxu0 0.0
      %293 = vmatpush2.msra.mxu0 0.0
      %294 = vmatprep.subr.mxu0 0.0
      %295 = vmatpush2.msra.mxu0 0.0
      %296 = vmatprep.subr.mxu0 0.0
      %297 = vmatpush2.msra.mxu0 0.0
      %298 = vmatprep.mubr.f32.mxu0 0.0
      %299 = vmatmul.mubr.f32.gmra.mxu0 %v220
      %v300 = vpop.f32.mrf.mxu0
      %v301 = vadd.f32 0.0, %v300
      %v302 = vpop.f32.mrf.mxu0
      %303 = vmatprep.mubr.f32.mxu0 0.0
      %304 = vmatmul.mubr.f32.gmra.mxu0 %v223
      %v305 = vpop.f32.mrf.mxu0
      %v306 = vadd.f32 0.0, %v305
      %v307 = vpop.f32.mrf.mxu0
      %308 = vmatprep.mubr.f32.mxu0 0.0
      %309 = vmatmul.mubr.f32.gmra.mxu0 %v226
      %v310 = vpop.f32.mrf.mxu0
      %v311 = vadd.f32 0.0, %v310
      %v312 = vpop.f32.mrf.mxu0
      %313 = vmatprep.mubr.f32.mxu0 0.0
      %314 = vmatmul.mubr.f32.gmra.mxu0 %v229
      %v315 = vpop.f32.mrf.mxu0
      %v316 = vadd.f32 0.0, %v315
      %v317 = vpop.f32.mrf.mxu0
      %318 = vdwg.mxu0
      %v320 = vsel %vm218, %v205, 0
      %v323 = vsel %vm218, %v206, 0
      %v326 = vsel %vm218, %v207, 0
      %v329 = vsel %vm218, %v208, 0
      %v331 = vsel %vm231, %v209, 0
      %333 = vmatprep.subr.mxu0 0.0
      %334 = vmatpush1.msra.mxu0 0.0
      %335 = vmatprep.subr.mxu0 0.0
      %336 = vmatpush1.msra.mxu0 0.0
      %337 = vmatprep.subr.mxu0 0.0
      %338 = vmatpush1.msra.mxu0 0.0
      %339 = vmatprep.subr.mxu0 0.0
      %340 = vmatpush1.msra.mxu0 0.0
      %341 = vmatprep.subr.mxu0 0.0
      %342 = vmatpush1.msra.mxu0 0.0
      %343 = vmatprep.subr.mxu0 0.0
      %344 = vmatpush1.msra.mxu0 0.0
      %345 = vmatprep.subr.mxu0 0.0
      %346 = vmatpush1.msra.mxu0 0.0
      %347 = vmatprep.subr.mxu0 0.0
      %348 = vmatpush1.msra.mxu0 0.0
      %349 = vmatprep.subr.mxu0 0.0
      %350 = vmatpush1.msra.mxu0 0.0
      %351 = vmatprep.subr.mxu0 0.0
      %352 = vmatpush1.msra.mxu0 0.0
      %353 = vmatprep.subr.mxu0 0.0
      %354 = vmatpush1.msra.mxu0 0.0
      %355 = vmatprep.subr.mxu0 0.0
      %356 = vmatpush1.msra.mxu0 0.0
      %357 = vmatprep.subr.mxu0 0.0
      %358 = vmatpush1.msra.mxu0 0.0
      %359 = vmatprep.subr.mxu0 0.0
      %360 = vmatpush1.msra.mxu0 0.0
      %361 = vmatprep.subr.mxu0 0.0
      %362 = vmatpush1.msra.mxu0 0.0
      %363 = vmatprep.subr.mxu0 0.0
      %364 = vmatpush1.msra.mxu0 %v331
      %365 = vmatprep.subr.mxu0 0.0
      %366 = vmatpush2.msra.mxu0 0.0
      %367 = vmatprep.subr.mxu0 0.0
      %368 = vmatpush2.msra.mxu0 0.0
      %369 = vmatprep.subr.mxu0 0.0
      %370 = vmatpush2.msra.mxu0 0.0
      %371 = vmatprep.subr.mxu0 0.0
      %372 = vmatpush2.msra.mxu0 0.0
      %373 = vmatprep.subr.mxu0 0.0
      %374 = vmatpush2.msra.mxu0 0.0
      %375 = vmatprep.subr.mxu0 0.0
      %376 = vmatpush2.msra.mxu0 0.0
      %377 = vmatprep.subr.mxu0 0.0
      %378 = vmatpush2.msra.mxu0 0.0
      %379 = vmatprep.subr.mxu0 0.0
      %380 = vmatpush2.msra.mxu0 0.0
      %381 = vmatprep.subr.mxu0 0.0
      %382 = vmatpush2.msra.mxu0 0.0
      %383 = vmatprep.subr.mxu0 0.0
      %384 = vmatpush2.msra.mxu0 0.0
      %385 = vmatprep.subr.mxu0 0.0
      %386 = vmatpush2.msra.mxu0 0.0
      %387 = vmatprep.subr.mxu0 0.0
      %388 = vmatpush2.msra.mxu0 0.0
      %389 = vmatprep.subr.mxu0 0.0
      %390 = vmatpush2.msra.mxu0 0.0
      %391 = vmatprep.subr.mxu0 0.0
      %392 = vmatpush2.msra.mxu0 0.0
      %393 = vmatprep.subr.mxu0 0.0
      %394 = vmatpush2.msra.mxu0 0.0
      %395 = vmatprep.subr.mxu0 0.0
      %396 = vmatpush2.msra.mxu0 0.0
      %397 = vmatprep.mubr.f32.mxu0 0.0
      %398 = vmatmul.mubr.f32.gmra.mxu0 %v320
      %v399 = vpop.f32.mrf.mxu0
      %v400 = vadd.f32 %v301, %v399
      %v401 = vpop.f32.mrf.mxu0
      %402 = vmatprep.mubr.f32.mxu0 0.0
      %403 = vmatmul.mubr.f32.gmra.mxu0 %v323
      %v404 = vpop.f32.mrf.mxu0
      %v405 = vadd.f32 %v306, %v404
      %v406 = vpop.f32.mrf.mxu0
      %407 = vmatprep.mubr.f32.mxu0 0.0
      %408 = vmatmul.mubr.f32.gmra.mxu0 %v326
      %v409 = vpop.f32.mrf.mxu0
      %v410 = vadd.f32 %v311, %v409
      %v411 = vpop.f32.mrf.mxu0
      %412 = vmatprep.mubr.f32.mxu0 0.0
      %413 = vmatmul.mubr.f32.gmra.mxu0 %v329
      %v414 = vpop.f32.mrf.mxu0
      %v415 = vadd.f32 %v316, %v414
      %v416 = vpop.f32.mrf.mxu0
      %417 = vdwg.mxu0
      %s418 = scalar_lea.vmem %s1, 64
      %v419 = vld [vmem:[%s418] sm:$0xff]
      %v420 = vld [vmem:[%s418 + $0x8] sm:$0xff]
      %v421 = vld [vmem:[%s418 + $0x10] sm:$0xff]
      %v422 = vld [vmem:[%s418 + $0x18] sm:$0xff]
      %423 = vrot.lane.b32.xlu0 %v209, 126
      %v424 = vpop.permute.xlu0 %423
      %v426 = vsel %vm218, %v419, 0
      %v429 = vsel %vm218, %v420, 0
      %v432 = vsel %vm218, %v421, 0
      %v435 = vsel %vm218, %v422, 0
      %v437 = vsel %vm231, %v424, 0
      %439 = vmatprep.subr.mxu0 0.0
      %440 = vmatpush1.msra.mxu0 0.0
      %441 = vmatprep.subr.mxu0 0.0
      %442 = vmatpush1.msra.mxu0 0.0
      %443 = vmatprep.subr.mxu0 0.0
      %444 = vmatpush1.msra.mxu0 0.0
      %445 = vmatprep.subr.mxu0 0.0
      %446 = vmatpush1.msra.mxu0 0.0
      %447 = vmatprep.subr.mxu0 0.0
      %448 = vmatpush1.msra.mxu0 0.0
      %449 = vmatprep.subr.mxu0 0.0
      %450 = vmatpush1.msra.mxu0 0.0
      %451 = vmatprep.subr.mxu0 0.0
      %452 = vmatpush1.msra.mxu0 0.0
      %453 = vmatprep.subr.mxu0 0.0
      %454 = vmatpush1.msra.mxu0 0.0
      %455 = vmatprep.subr.mxu0 0.0
      %456 = vmatpush1.msra.mxu0 0.0
      %457 = vmatprep.subr.mxu0 0.0
      %458 = vmatpush1.msra.mxu0 0.0
      %459 = vmatprep.subr.mxu0 0.0
      %460 = vmatpush1.msra.mxu0 0.0
      %461 = vmatprep.subr.mxu0 0.0
      %462 = vmatpush1.msra.mxu0 0.0
      %463 = vmatprep.subr.mxu0 0.0
      %464 = vmatpush1.msra.mxu0 0.0
      %465 = vmatprep.subr.mxu0 0.0
      %466 = vmatpush1.msra.mxu0 0.0
      %467 = vmatprep.subr.mxu0 0.0
      %468 = vmatpush1.msra.mxu0 0.0
      %469 = vmatprep.subr.mxu0 0.0
      %470 = vmatpush1.msra.mxu0 %v437
      %471 = vmatprep.subr.mxu0 0.0
      %472 = vmatpush2.msra.mxu0 0.0
      %473 = vmatprep.subr.mxu0 0.0
      %474 = vmatpush2.msra.mxu0 0.0
      %475 = vmatprep.subr.mxu0 0.0
      %476 = vmatpush2.msra.mxu0 0.0
      %477 = vmatprep.subr.mxu0 0.0
      %478 = vmatpush2.msra.mxu0 0.0
      %479 = vmatprep.subr.mxu0 0.0
      %480 = vmatpush2.msra.mxu0 0.0
      %481 = vmatprep.subr.mxu0 0.0
      %482 = vmatpush2.msra.mxu0 0.0
      %483 = vmatprep.subr.mxu0 0.0
      %484 = vmatpush2.msra.mxu0 0.0
      %485 = vmatprep.subr.mxu0 0.0
      %486 = vmatpush2.msra.mxu0 0.0
      %487 = vmatprep.subr.mxu0 0.0
      %488 = vmatpush2.msra.mxu0 0.0
      %489 = vmatprep.subr.mxu0 0.0
      %490 = vmatpush2.msra.mxu0 0.0
      %491 = vmatprep.subr.mxu0 0.0
      %492 = vmatpush2.msra.mxu0 0.0
      %493 = vmatprep.subr.mxu0 0.0
      %494 = vmatpush2.msra.mxu0 0.0
      %495 = vmatprep.subr.mxu0 0.0
      %496 = vmatpush2.msra.mxu0 0.0
      %497 = vmatprep.subr.mxu0 0.0
      %498 = vmatpush2.msra.mxu0 0.0
      %499 = vmatprep.subr.mxu0 0.0
      %500 = vmatpush2.msra.mxu0 0.0
      %501 = vmatprep.subr.mxu0 0.0
      %502 = vmatpush2.msra.mxu0 0.0
      %503 = vmatprep.mubr.f32.mxu0 0.0
      %504 = vmatmul.mubr.f32.gmra.mxu0 %v426
      %v505 = vpop.f32.mrf.mxu0
      %v506 = vadd.f32 0.0, %v505
      %v507 = vpop.f32.mrf.mxu0
      %508 = vmatprep.mubr.f32.mxu0 0.0
      %509 = vmatmul.mubr.f32.gmra.mxu0 %v429
      %v510 = vpop.f32.mrf.mxu0
      %v511 = vadd.f32 0.0, %v510
      %v512 = vpop.f32.mrf.mxu0
      %513 = vmatprep.mubr.f32.mxu0 0.0
      %514 = vmatmul.mubr.f32.gmra.mxu0 %v432
      %v515 = vpop.f32.mrf.mxu0
      %v516 = vadd.f32 0.0, %v515
      %v517 = vpop.f32.mrf.mxu0
      %518 = vmatprep.mubr.f32.mxu0 0.0
      %519 = vmatmul.mubr.f32.gmra.mxu0 %v435
      %v520 = vpop.f32.mrf.mxu0
      %v521 = vadd.f32 0.0, %v520
      %v522 = vpop.f32.mrf.mxu0
      %523 = vdwg.mxu0
      %v524 = vadd.f32 %v400, %v506
      %v525 = vadd.f32 %v405, %v511
      %v526 = vadd.f32 %v410, %v516
      %v527 = vadd.f32 %v415, %v521
      %v528 = vld [vmem:[%s2] sm:$0xff]
      %v529 = vld [vmem:[%s2 + $0x8] sm:$0xff]
      %v530 = vld [vmem:[%s2 + $0x10] sm:$0xff]
      %v531 = vld [vmem:[%s2 + $0x18] sm:$0xff]
      %533 = vset.pattern.permute.xlu0 0
      %534 = vperm.xlu0 %533, %v528
      %v535 = vpop.permute.xlu0 %534
      %538 = vset.pattern.permute.xlu0 0
      %539 = vperm.xlu0 %538, %v529
      %v540 = vpop.permute.xlu0 %539
      %543 = vset.pattern.permute.xlu0 0
      %544 = vperm.xlu0 %543, %v530
      %v545 = vpop.permute.xlu0 %544
      %548 = vset.pattern.permute.xlu0 0
      %549 = vperm.xlu0 %548, %v531
      %v550 = vpop.permute.xlu0 %549
      %v552 = vadd.f32 %v524, %v535
      %v553 = vadd.f32 %v525, %v540
      %v554 = vadd.f32 %v526, %v545
      %v555 = vadd.f32 %v527, %v550
      %s556 = sld [smem:[#allocation3]]
      %vm557 = vcmp.gt.f32.partialorder %v552, 0.0
      %vm558 = vcmp.gt.f32.partialorder %v553, 0.0
      %vm559 = vcmp.gt.f32.partialorder %v554, 0.0
      %vm560 = vcmp.gt.f32.partialorder %v555, 0.0
      %v561 = vstv %s556
      %v562 = vmul.f32 %v561, %v552
      %v563 = vmul.f32 %v561, %v553
      %v564 = vmul.f32 %v561, %v554
      %v565 = vmul.f32 %v561, %v555
      %v566 = vsel %vm557, %v552, %v562
      %v567 = vsel %vm558, %v553, %v563
      %v568 = vsel %vm559, %v554, %v564
      %v569 = vsel %vm560, %v555, %v565
      %vm570 = vcmask 130048
      %571 = vst.msk [vmem:[%s195] sm:$0xff] %vm570, %v566
      %572 = vst.msk [vmem:[%s195 + $0x8] sm:$0xff] %vm570, %v567
      %573 = vst.msk [vmem:[%s195 + $0x10] sm:$0xff] %vm570, %v568
      %574 = vst.msk [vmem:[%s195 + $0x18] sm:$0xff] %vm570, %v569
      %p575 = scmp.lt.s32.totalorder %s16, 1
      %s576 = scalar_select %p575, %s16, 1
      %s577 = smul.addr %s576, 4
      %s578 = smul.addr %s577, 8
      %s579 = scalar_lea.vmem %s4, %s578
      // Predicated region
      $region37: #{conv_block.1} parent=35 // pred_check
        %p580 = pneg %p123
      $region38: #{conv_block.1} parent=35 // pred_check_branch
        %582 = sbr.rel (%p580) target = $region40
      $region39: #{conv_block.1} parent=35 // pred_region
        _
      $region40: #{conv_block.1} parent=35 // pred_fallthru
        _
    $region36: #{conv_block.1} parent=5 // pred_fallthru
      _
    %p583 = scmp.le.s32.totalorder 2, %s11
    // Predicated region
    $region41: #{conv_block.1} parent=5 // pred_check
      %p584 = pneg %p583
    $region42: #{conv_block.1} parent=5 // pred_check_branch
      %586 = sbr.rel (%p584) target = $region44
    $region43: #{conv_block.1} parent=5 // pred_region
      %s587 = ssub.s32 %s11, 2
      // Predicated region
      $region45: #{conv_block.1} parent=43 // pred_check
        %p588 = pneg %p129
      $region46: #{conv_block.1} parent=43 // pred_check_branch
        %590 = sbr.rel (%p588) target = $region48
      $region47: #{conv_block.1} parent=43 // pred_region
        %p591 = scmp.lt.s32.totalorder %s17, 1
        %s592 = scalar_select %p591, %s17, 1
        %s593 = smul.addr %s592, 4
        %s594 = smul.addr %s593, 8
        %s595 = scalar_lea.vmem %s4, %s594
      $region48: #{conv_block.1} parent=43 // pred_fallthru
        _
    $region44: #{conv_block.1} parent=5 // pred_fallthru
      _
  $region6: #{conv_block.1} parent=0 // loop_footer
    %s15 = sadd.s32 1, %s11
  $region7: #{conv_block.1} parent=0 // loop_footer_branch
    %10 = sbr.rel target = $region3
  $region8: #{conv_block.1} parent=0 // loop_exit
    _

</llo_original>
